<compile_context>
chip_gen: v5e
topology: v5e:2x2
jax: 0.10.0
libtpu: 0.0.40
codegen_flags: <defaults>
</compile_context>

<pallas_src>
import jax
import jax.numpy as jnp
from jax import lax
from jax.experimental import pallas as pl
from jax.experimental.pallas import tpu as pltpu


# ----------------------------------------------------------------------------- kernel
def _bigru_kernel(len_ref,                       # (Bp, 1) int32
                  emb_ref,                       # (T, Bp, Hp) f32
                  wih_f_ref, whh_f_ref, bx_f_ref, bhn_f_ref,   # fwd fused params
                  wih_b_ref, whh_b_ref, bx_b_ref, bhn_b_ref,   # bwd fused params
                  out_ref,                       # (T, Bp, Hp) f32 : fwd + bwd sum
                  hn_f_ref, hn_b_ref):           # (Bp, Hp) each
    T, Bp, Hp = emb_ref.shape
    lengths = len_ref[...]                       # (Bp, 1) int32

    def fused_cell(x, h, wih_ref, whh_ref, bx_ref, bhn_ref):
        # x, h: (Bp, Hp); wih/whh: (Hp, 3Hp) with gates [r|z|n] along the output dim.
        # bx = [bih_r+bhh_r | bih_z+bhh_z | bih_n] (1, 3Hp); bhn = bhh_n (1, Hp).
        gx = jnp.dot(x, wih_ref[...], preferred_element_type=jnp.float32) + bx_ref[...]
        gh = jnp.dot(h, whh_ref[...], preferred_element_type=jnp.float32)
        r = jax.nn.sigmoid(gx[:, :Hp] + gh[:, :Hp])
        z = jax.nn.sigmoid(gx[:, Hp:2 * Hp] + gh[:, Hp:2 * Hp])
        # bhh_n must be applied before the r* multiply (PyTorch GRU semantics).
        n = jnp.tanh(gx[:, 2 * Hp:] + r * (gh[:, 2 * Hp:] + bhn_ref[...]))
        return (1.0 - z) * n + z * h

    h0 = jnp.zeros((Bp, Hp), jnp.float32)

    # ---- forward direction: t = 0 .. T-1, writes out[t] ----
    def fwd_body(t, h):
        h_new = fused_cell(emb_ref[t], h, wih_f_ref, whh_f_ref, bx_f_ref, bhn_f_ref)
        valid = lengths > t                      # (Bp, 1) bool
        out_ref[t] = jnp.where(valid, h_new, 0.0)
        return jnp.where(valid, h_new, h)

    hf = lax.fori_loop(0, T, fwd_body, h0)

    # ---- backward direction: t = T-1 .. 0, accumulates into out[t] (folds the sum) ----
    def bwd_body(i, h):
        t = T - 1 - i
        h_new = fused_cell(emb_ref[t], h, wih_b_ref, whh_b_ref, bx_b_ref, bhn_b_ref)
        valid = lengths > t
        out_ref[t] = out_ref[t] + jnp.where(valid, h_new, 0.0)
        return jnp.where(valid, h_new, h)

    hb = lax.fori_loop(0, T, bwd_body, h0)

    # Final hidden states, written exactly once.
    hn_f_ref[...] = hf
    hn_b_ref[...] = hb


# ----------------------------------------------------------------------------- wrapper
def _round_up(x, m):
    return (x + m - 1) // m * m


def _fuse_and_pad(wih, whh, bih, bhh, H, Hp):
    """(3,H,H)/(3,1,H) per-gate params -> fused, zero-padded lane-dense layout.

    Zero padding is exactly neutral: padded input lanes of x/h are zero and padded
    weight rows/cols and bias lanes are zero, so padded hidden lanes evolve as
    h_pad <- 0.5*h_pad starting from 0, i.e. stay identically zero.
    """
    def pad_w(w):                                  # (H, H) -> (Hp, Hp)
        return jnp.pad(w, ((0, Hp - H), (0, Hp - H)))

    def pad_b(b):                                  # (1, H) -> (1, Hp)
        return jnp.pad(b, ((0, 0), (0, Hp - H)))

    wih_fused = jnp.concatenate([pad_w(wih[g]) for g in range(3)], axis=1)  # (Hp, 3Hp)
    whh_fused = jnp.concatenate([pad_w(whh[g]) for g in range(3)], axis=1)  # (Hp, 3Hp)
    bx = jnp.concatenate([pad_b(bih[0] + bhh[0]),          # r: pre-summed
                          pad_b(bih[1] + bhh[1]),          # z: pre-summed
                          pad_b(bih[2])], axis=1)          # n: input bias only
    bhn = pad_b(bhh[2])                                     # n: hidden bias, kept apart
    return wih_fused, whh_fused, bx, bhn


@jax.jit
def encoder_rnn_forward(input_seq, input_lengths, embedding_weight, params):
    """input_seq (T,B) int32, input_lengths (B,) int32 (max == T) -> (outputs, hidden)."""
    T, B = input_seq.shape
    H = embedding_weight.shape[1]
    Bp = _round_up(B, 8)          # sublane-dense batch
    Hp = _round_up(H, 128)        # lane-dense hidden

    # Glue: embedding lookup (gather) in plain JAX; table zero-padded along H.
    # TODO(synk): move the gather in-kernel via scalar-prefetched token ids.
    emb_w = jnp.pad(embedding_weight.astype(jnp.float32), ((0, 0), (0, Hp - H)))
    embedded = emb_w[input_seq]                                   # (T, B, Hp)
    embedded = jnp.pad(embedded, ((0, 0), (0, Bp - B), (0, 0)))   # (T, Bp, Hp)
    lengths2d = jnp.pad(input_lengths.astype(jnp.int32), (0, Bp - B)).reshape(Bp, 1)

    wih_f, whh_f, bx_f, bhn_f = _fuse_and_pad(
        params["wih_f"], params["whh_f"], params["bih_f"], params["bhh_f"], H, Hp)
    wih_b, whh_b, bx_b, bhn_b = _fuse_and_pad(
        params["wih_b"], params["whh_b"], params["bih_b"], params["bhh_b"], H, Hp)

    full = lambda shape: pl.BlockSpec(shape, lambda i: (0,) * len(shape))

    grid_spec = pltpu.PrefetchScalarGridSpec(
        num_scalar_prefetch=0,
        grid=(1,),                                   # recurrence handled inside kernel
        in_specs=[
            full((Bp, 1)),                           # lengths
            full((T, Bp, Hp)),                       # embedded (whole sequence in VMEM)
            full((Hp, 3 * Hp)), full((Hp, 3 * Hp)), full((1, 3 * Hp)), full((1, Hp)),
            full((Hp, 3 * Hp)), full((Hp, 3 * Hp)), full((1, 3 * Hp)), full((1, Hp)),
        ],
        out_specs=[
            full((T, Bp, Hp)),                       # outputs (fwd + bwd already summed)
            full((Bp, Hp)),                          # h_n forward
            full((Bp, Hp)),                          # h_n backward
        ],
    )

    out, hn_f, hn_b = pl.pallas_call(
        _bigru_kernel,
        out_shape=(
            jax.ShapeDtypeStruct((T, Bp, Hp), jnp.float32),
            jax.ShapeDtypeStruct((Bp, Hp), jnp.float32),
            jax.ShapeDtypeStruct((Bp, Hp), jnp.float32),
        ),
        grid_spec=grid_spec,
        compiler_params=pltpu.CompilerParams(
            dimension_semantics=("arbitrary",),
            vmem_limit_bytes=64 * 1024 * 1024),
    )(lengths2d, embedded,
      wih_f, whh_f, bx_f, bhn_f,
      wih_b, whh_b, bx_b, bhn_b)

    outputs = out[:, :B, :H]                               # strip padding
    hidden = jnp.stack([hn_f[:B, :H], hn_b[:B, :H]], axis=0)   # (2, B, H)
    return outputs, hidden


# ----------------------------------------------------------------------------- reference
def _ref_cell(x, h, wih, whh, bih, bhh):
    r = jax.nn.sigmoid(x @ wih[0] + bih[0] + h @ whh[0] + bhh[0])
    z = jax.nn.sigmoid(x @ wih[1] + bih[1] + h @ whh[1] + bhh[1])
    n = jnp.tanh(x @ wih[2] + bih[2] + r * (h @ whh[2] + bhh[2]))
    return (1.0 - z) * n + z * h


def encoder_rnn_reference(input_seq, input_lengths, embedding_weight, params):
    T, B = input_seq.shape
    embedded = embedding_weight[input_seq].astype(jnp.float32)
    H = embedding_weight.shape[1]
    hf = jnp.zeros((B, H), jnp.float32)
    hb = jnp.zeros((B, H), jnp.float32)
    out_f, out_b = [], [None] * T
    for t in range(T):
        hn = _ref_cell(embedded[t], hf, params["wih_f"], params["whh_f"],
                       params["bih_f"], params["bhh_f"])
        v = (input_lengths > t)[:, None]
        hf = jnp.where(v, hn, hf)
        out_f.append(jnp.where(v, hn, 0.0))
    for t in range(T - 1, -1, -1):
        hn = _ref_cell(embedded[t], hb, params["wih_b"], params["whh_b"],
                       params["bih_b"], params["bhh_b"])
        v = (input_lengths > t)[:, None]
        hb = jnp.where(v, hn, hb)
        out_b[t] = jnp.where(v, hn, 0.0)
    outputs = jnp.stack(out_f) + jnp.stack(out_b)
    hidden = jnp.stack([hf, hb], axis=0)
    return outputs, hidden


# ----------------------------------------------------------------------------- main
if __name__ == "__main__":
    T, B, H, VOCAB = 8, 4, 32, 16
    key = jax.random.PRNGKey(0)
    k_emb, k_seq, *k_w = jax.random.split(key, 11)

    embedding_weight = jax.random.normal(k_emb, (VOCAB, H), jnp.float32)
    input_seq = jax.random.randint(k_seq, (T, B), 0, VOCAB, dtype=jnp.int32)
    # pack_padded_sequence requires lengths sorted descending; max length == T.
    input_lengths = jnp.array([8, 7, 5, 3], dtype=jnp.int32)

    bound = 1.0 / jnp.sqrt(H)
    u = lambda k, s: jax.random.uniform(k, s, jnp.float32, -bound, bound)
    params = {
        # Stacked per-gate weights, already transposed to (in, out): (3, H, H).
        "wih_f": u(k_w[0], (3, H, H)), "whh_f": u(k_w[1], (3, H, H)),
        "bih_f": u(k_w[2], (3, 1, H)), "bhh_f": u(k_w[3], (3, 1, H)),
        "wih_b": u(k_w[4], (3, H, H)), "whh_b": u(k_w[5], (3, H, H)),
        "bih_b": u(k_w[6], (3, 1, H)), "bhh_b": u(k_w[7], (3, 1, H)),
    }

    outputs, hidden = encoder_rnn_forward(input_seq, input_lengths,
                                          embedding_weight, params)
    jax.block_until_ready((outputs, hidden))

    ref_out, ref_hid = encoder_rnn_reference(input_seq, input_lengths,
                                             embedding_weight, params)
    assert outputs.shape == (T, B, H) and hidden.shape == (2, B, H)
    assert jnp.allclose(outputs, ref_out, atol=1e-5, rtol=1e-5)
    assert jnp.allclose(hidden, ref_hid, atol=1e-5, rtol=1e-5)

    print("KERNEL_OK")
</pallas_src>

<mosaic_0001>
module attributes {stable_mosaic.version = 11 : i64} {
  func.func @_bigru_kernel(%arg0: i32, %arg1: memref<8x1xi32, #tpu.memory_space<vmem>>, %arg2: memref<8x8x128xf32, #tpu.memory_space<vmem>>, %arg3: memref<128x384xf32, #tpu.memory_space<vmem>>, %arg4: memref<128x384xf32, #tpu.memory_space<vmem>>, %arg5: memref<1x384xf32, #tpu.memory_space<vmem>>, %arg6: memref<1x128xf32, #tpu.memory_space<vmem>>, %arg7: memref<128x384xf32, #tpu.memory_space<vmem>>, %arg8: memref<128x384xf32, #tpu.memory_space<vmem>>, %arg9: memref<1x384xf32, #tpu.memory_space<vmem>>, %arg10: memref<1x128xf32, #tpu.memory_space<vmem>>, %arg11: memref<8x8x128xf32, #tpu.memory_space<vmem>>, %arg12: memref<8x128xf32, #tpu.memory_space<vmem>>, %arg13: memref<8x128xf32, #tpu.memory_space<vmem>>) attributes {dimension_semantics = [#tpu.dimension_semantics<arbitrary>], iteration_bounds = array<i64: 1>, scalar_prefetch = 0 : i64, scratch_operands = 0 : i64, tpu.core_type = #tpu.core_type<tc>, window_params = [{pipeline_mode = #tpu.pipeline_mode<synchronous>, transform_indices = @transform_0, window_bounds = array<i64: 8, 1>}, {pipeline_mode = #tpu.pipeline_mode<synchronous>, transform_indices = @transform_1, window_bounds = array<i64: 8, 8, 128>}, {pipeline_mode = #tpu.pipeline_mode<synchronous>, transform_indices = @transform_2, window_bounds = array<i64: 128, 384>}, {pipeline_mode = #tpu.pipeline_mode<synchronous>, transform_indices = @transform_3, window_bounds = array<i64: 128, 384>}, {pipeline_mode = #tpu.pipeline_mode<synchronous>, transform_indices = @transform_4, window_bounds = array<i64: 1, 384>}, {pipeline_mode = #tpu.pipeline_mode<synchronous>, transform_indices = @transform_5, window_bounds = array<i64: 1, 128>}, {pipeline_mode = #tpu.pipeline_mode<synchronous>, transform_indices = @transform_6, window_bounds = array<i64: 128, 384>}, {pipeline_mode = #tpu.pipeline_mode<synchronous>, transform_indices = @transform_7, window_bounds = array<i64: 128, 384>}, {pipeline_mode = #tpu.pipeline_mode<synchronous>, transform_indices = @transform_8, window_bounds = array<i64: 1, 384>}, {pipeline_mode = #tpu.pipeline_mode<synchronous>, transform_indices = @transform_9, window_bounds = array<i64: 1, 128>}, {pipeline_mode = #tpu.pipeline_mode<synchronous>, transform_indices = @transform_10, window_bounds = array<i64: 8, 8, 128>}, {pipeline_mode = #tpu.pipeline_mode<synchronous>, transform_indices = @transform_11, window_bounds = array<i64: 8, 128>}, {pipeline_mode = #tpu.pipeline_mode<synchronous>, transform_indices = @transform_12, window_bounds = array<i64: 8, 128>}]} {
    %c0 = arith.constant 0 : index
    %c0_0 = arith.constant 0 : index
    %0 = vector.load %arg1[%c0, %c0_0] : memref<8x1xi32, #tpu.memory_space<vmem>>, vector<8x1xi32>
    %cst = arith.constant 0.000000e+00 : f32
    %1 = vector.broadcast %cst : f32 to vector<8x128xf32>
    %c0_i32 = arith.constant 0 : i32
    %c8_i32 = arith.constant 8 : i32
    %2 = arith.addi %c0_i32, %c8_i32 : i32
    %c1_i32 = arith.constant 1 : i32
    %3 = scf.for %arg14 = %c0_i32 to %2 step %c1_i32 iter_args(%arg15 = %1) -> (vector<8x128xf32>)  : i32 {
      %8 = arith.index_cast %arg14 : i32 to index
      %c0_10 = arith.constant 0 : index
      %c0_11 = arith.constant 0 : index
      %9 = vector.load %arg2[%8, %c0_10, %c0_11] : memref<8x8x128xf32, #tpu.memory_space<vmem>>, vector<1x8x128xf32>
      %10 = vector.shape_cast %9 : vector<1x8x128xf32> to vector<8x128xf32>
      %c0_12 = arith.constant 0 : index
      %c0_13 = arith.constant 0 : index
      %11 = vector.load %arg3[%c0_12, %c0_13] : memref<128x384xf32, #tpu.memory_space<vmem>>, vector<128x384xf32>
      %cst_14 = arith.constant dense<0.000000e+00> : vector<8x384xf32>
      %12 = tpu.matmul %10, %11, %cst_14 {dimension_numbers = #tpu.dot_dimension_numbers<[1], [0], [0], [1], [0, 0, 1, 1], [], []>} : vector<8x128xf32>, vector<128x384xf32>, vector<8x384xf32> -> vector<8x384xf32>
      %c0_15 = arith.constant 0 : index
      %c0_16 = arith.constant 0 : index
      %13 = vector.load %arg5[%c0_15, %c0_16] : memref<1x384xf32, #tpu.memory_space<vmem>>, vector<1x384xf32>
      %14 = vector.broadcast %13 : vector<1x384xf32> to vector<8x384xf32>
      %15 = arith.addf %12, %14 : vector<8x384xf32>
      %c0_17 = arith.constant 0 : index
      %c0_18 = arith.constant 0 : index
      %16 = vector.load %arg4[%c0_17, %c0_18] : memref<128x384xf32, #tpu.memory_space<vmem>>, vector<128x384xf32>
      %cst_19 = arith.constant dense<0.000000e+00> : vector<8x384xf32>
      %17 = tpu.matmul %arg15, %16, %cst_19 {dimension_numbers = #tpu.dot_dimension_numbers<[1], [0], [0], [1], [0, 0, 1, 1], [], []>} : vector<8x128xf32>, vector<128x384xf32>, vector<8x384xf32> -> vector<8x384xf32>
      %18 = vector.extract_strided_slice %15 {offsets = [0, 0], sizes = [8, 128], strides = [1, 1]} : vector<8x384xf32> to vector<8x128xf32>
      %19 = vector.extract_strided_slice %17 {offsets = [0, 0], sizes = [8, 128], strides = [1, 1]} : vector<8x384xf32> to vector<8x128xf32>
      %20 = arith.addf %18, %19 : vector<8x128xf32>
      %21 = arith.negf %20 : vector<8x128xf32>
      %22 = math.exp %21 : vector<8x128xf32>
      %cst_20 = arith.constant 1.000000e+00 : f32
      %23 = vector.broadcast %cst_20 : f32 to vector<8x128xf32>
      %24 = arith.addf %23, %22 : vector<8x128xf32>
      %25 = arith.divf %23, %24 : vector<8x128xf32>
      %26 = vector.extract_strided_slice %15 {offsets = [0, 128], sizes = [8, 128], strides = [1, 1]} : vector<8x384xf32> to vector<8x128xf32>
      %27 = vector.extract_strided_slice %17 {offsets = [0, 128], sizes = [8, 128], strides = [1, 1]} : vector<8x384xf32> to vector<8x128xf32>
      %28 = arith.addf %26, %27 : vector<8x128xf32>
      %29 = arith.negf %28 : vector<8x128xf32>
      %30 = math.exp %29 : vector<8x128xf32>
      %cst_21 = arith.constant 1.000000e+00 : f32
      %31 = vector.broadcast %cst_21 : f32 to vector<8x128xf32>
      %32 = arith.addf %31, %30 : vector<8x128xf32>
      %33 = arith.divf %31, %32 : vector<8x128xf32>
      %34 = vector.extract_strided_slice %15 {offsets = [0, 256], sizes = [8, 128], strides = [1, 1]} : vector<8x384xf32> to vector<8x128xf32>
      %35 = vector.extract_strided_slice %17 {offsets = [0, 256], sizes = [8, 128], strides = [1, 1]} : vector<8x384xf32> to vector<8x128xf32>
      %c0_22 = arith.constant 0 : index
      %c0_23 = arith.constant 0 : index
      %36 = vector.load %arg6[%c0_22, %c0_23] : memref<1x128xf32, #tpu.memory_space<vmem>>, vector<1x128xf32>
      %37 = vector.broadcast %36 : vector<1x128xf32> to vector<8x128xf32>
      %38 = arith.addf %35, %37 : vector<8x128xf32>
      %39 = arith.mulf %25, %38 : vector<8x128xf32>
      %40 = arith.addf %34, %39 : vector<8x128xf32>
      %41 = math.tanh %40 : vector<8x128xf32>
      %cst_24 = arith.constant 1.000000e+00 : f32
      %42 = vector.broadcast %cst_24 : f32 to vector<8x128xf32>
      %43 = arith.subf %42, %33 : vector<8x128xf32>
      %44 = arith.mulf %43, %41 : vector<8x128xf32>
      %45 = arith.mulf %33, %arg15 : vector<8x128xf32>
      %46 = arith.addf %44, %45 : vector<8x128xf32>
      %47 = vector.broadcast %arg14 : i32 to vector<8x1xi32>
      %48 = arith.cmpi sgt, %0, %47 : vector<8x1xi32>
      %cst_25 = arith.constant 0.000000e+00 : f32
      %49 = vector.shape_cast %48 : vector<8x1xi1> to vector<8x1xi1>
      %50 = vector.broadcast %49 : vector<8x1xi1> to vector<8x128xi1>
      %51 = vector.broadcast %cst_25 : f32 to vector<8x128xf32>
      %52 = arith.select %50, %46, %51 : vector<8x128xi1>, vector<8x128xf32>
      %53 = arith.index_cast %arg14 : i32 to index
      %c0_26 = arith.constant 0 : index
      %c0_27 = arith.constant 0 : index
      %54 = vector.load %arg11[%53, %c0_26, %c0_27] : memref<8x8x128xf32, #tpu.memory_space<vmem>>, vector<1x8x128xf32>
      %55 = vector.shape_cast %54 : vector<1x8x128xf32> to vector<8x128xf32>
      %56 = vector.shape_cast %52 : vector<8x128xf32> to vector<1x8x128xf32>
      tpu.vector_store %arg11[%53, %c0_26, %c0_27], %56 {strides = array<i32>} : memref<8x8x128xf32, #tpu.memory_space<vmem>>, vector<1x8x128xf32>,
      %57 = vector.shape_cast %48 : vector<8x1xi1> to vector<8x1xi1>
      %58 = vector.broadcast %57 : vector<8x1xi1> to vector<8x128xi1>
      %59 = arith.select %58, %46, %arg15 : vector<8x128xi1>, vector<8x128xf32>
      scf.yield %59 : vector<8x128xf32>
    }
    %c8_i32_1 = arith.constant 8 : i32
    %c0_i32_2 = arith.constant 0 : i32
    %c8_i32_3 = arith.constant 8 : i32
    %4 = arith.addi %c0_i32_2, %c8_i32_3 : i32
    %c1_i32_4 = arith.constant 1 : i32
    %5 = scf.for %arg14 = %c0_i32_2 to %4 step %c1_i32_4 iter_args(%arg15 = %1) -> (vector<8x128xf32>)  : i32 {
      %c7_i32 = arith.constant 7 : i32
      %8 = arith.subi %c7_i32, %arg14 : i32
      %9 = arith.index_cast %8 : i32 to index
      %c0_10 = arith.constant 0 : index
      %c0_11 = arith.constant 0 : index
      %10 = vector.load %arg2[%9, %c0_10, %c0_11] : memref<8x8x128xf32, #tpu.memory_space<vmem>>, vector<1x8x128xf32>
      %11 = vector.shape_cast %10 : vector<1x8x128xf32> to vector<8x128xf32>
      %c0_12 = arith.constant 0 : index
      %c0_13 = arith.constant 0 : index
      %12 = vector.load %arg7[%c0_12, %c0_13] : memref<128x384xf32, #tpu.memory_space<vmem>>, vector<128x384xf32>
      %cst_14 = arith.constant dense<0.000000e+00> : vector<8x384xf32>
      %13 = tpu.matmul %11, %12, %cst_14 {dimension_numbers = #tpu.dot_dimension_numbers<[1], [0], [0], [1], [0, 0, 1, 1], [], []>} : vector<8x128xf32>, vector<128x384xf32>, vector<8x384xf32> -> vector<8x384xf32>
      %c0_15 = arith.constant 0 : index
      %c0_16 = arith.constant 0 : index
      %14 = vector.load %arg9[%c0_15, %c0_16] : memref<1x384xf32, #tpu.memory_space<vmem>>, vector<1x384xf32>
      %15 = vector.broadcast %14 : vector<1x384xf32> to vector<8x384xf32>
      %16 = arith.addf %13, %15 : vector<8x384xf32>
      %c0_17 = arith.constant 0 : index
      %c0_18 = arith.constant 0 : index
      %17 = vector.load %arg8[%c0_17, %c0_18] : memref<128x384xf32, #tpu.memory_space<vmem>>, vector<128x384xf32>
      %cst_19 = arith.constant dense<0.000000e+00> : vector<8x384xf32>
      %18 = tpu.matmul %arg15, %17, %cst_19 {dimension_numbers = #tpu.dot_dimension_numbers<[1], [0], [0], [1], [0, 0, 1, 1], [], []>} : vector<8x128xf32>, vector<128x384xf32>, vector<8x384xf32> -> vector<8x384xf32>
      %19 = vector.extract_strided_slice %16 {offsets = [0, 0], sizes = [8, 128], strides = [1, 1]} : vector<8x384xf32> to vector<8x128xf32>
      %20 = vector.extract_strided_slice %18 {offsets = [0, 0], sizes = [8, 128], strides = [1, 1]} : vector<8x384xf32> to vector<8x128xf32>
      %21 = arith.addf %19, %20 : vector<8x128xf32>
      %22 = arith.negf %21 : vector<8x128xf32>
      %23 = math.exp %22 : vector<8x128xf32>
      %cst_20 = arith.constant 1.000000e+00 : f32
      %24 = vector.broadcast %cst_20 : f32 to vector<8x128xf32>
      %25 = arith.addf %24, %23 : vector<8x128xf32>
      %26 = arith.divf %24, %25 : vector<8x128xf32>
      %27 = vector.extract_strided_slice %16 {offsets = [0, 128], sizes = [8, 128], strides = [1, 1]} : vector<8x384xf32> to vector<8x128xf32>
      %28 = vector.extract_strided_slice %18 {offsets = [0, 128], sizes = [8, 128], strides = [1, 1]} : vector<8x384xf32> to vector<8x128xf32>
      %29 = arith.addf %27, %28 : vector<8x128xf32>
      %30 = arith.negf %29 : vector<8x128xf32>
      %31 = math.exp %30 : vector<8x128xf32>
      %cst_21 = arith.constant 1.000000e+00 : f32
      %32 = vector.broadcast %cst_21 : f32 to vector<8x128xf32>
      %33 = arith.addf %32, %31 : vector<8x128xf32>
      %34 = arith.divf %32, %33 : vector<8x128xf32>
      %35 = vector.extract_strided_slice %16 {offsets = [0, 256], sizes = [8, 128], strides = [1, 1]} : vector<8x384xf32> to vector<8x128xf32>
      %36 = vector.extract_strided_slice %18 {offsets = [0, 256], sizes = [8, 128], strides = [1, 1]} : vector<8x384xf32> to vector<8x128xf32>
      %c0_22 = arith.constant 0 : index
      %c0_23 = arith.constant 0 : index
      %37 = vector.load %arg10[%c0_22, %c0_23] : memref<1x128xf32, #tpu.memory_space<vmem>>, vector<1x128xf32>
      %38 = vector.broadcast %37 : vector<1x128xf32> to vector<8x128xf32>
      %39 = arith.addf %36, %38 : vector<8x128xf32>
      %40 = arith.mulf %26, %39 : vector<8x128xf32>
      %41 = arith.addf %35, %40 : vector<8x128xf32>
      %42 = math.tanh %41 : vector<8x128xf32>
      %cst_24 = arith.constant 1.000000e+00 : f32
      %43 = vector.broadcast %cst_24 : f32 to vector<8x128xf32>
      %44 = arith.subf %43, %34 : vector<8x128xf32>
      %45 = arith.mulf %44, %42 : vector<8x128xf32>
      %46 = arith.mulf %34, %arg15 : vector<8x128xf32>
      %47 = arith.addf %45, %46 : vector<8x128xf32>
      %48 = vector.broadcast %8 : i32 to vector<8x1xi32>
      %49 = arith.cmpi sgt, %0, %48 : vector<8x1xi32>
      %50 = arith.index_cast %8 : i32 to index
      %c0_25 = arith.constant 0 : index
      %c0_26 = arith.constant 0 : index
      %51 = vector.load %arg11[%50, %c0_25, %c0_26] : memref<8x8x128xf32, #tpu.memory_space<vmem>>, vector<1x8x128xf32>
      %52 = vector.shape_cast %51 : vector<1x8x128xf32> to vector<8x128xf32>
      %cst_27 = arith.constant 0.000000e+00 : f32
      %53 = vector.shape_cast %49 : vector<8x1xi1> to vector<8x1xi1>
      %54 = vector.broadcast %53 : vector<8x1xi1> to vector<8x128xi1>
      %55 = vector.broadcast %cst_27 : f32 to vector<8x128xf32>
      %56 = arith.select %54, %47, %55 : vector<8x128xi1>, vector<8x128xf32>
      %57 = arith.addf %52, %56 : vector<8x128xf32>
      %58 = arith.index_cast %8 : i32 to index
      %c0_28 = arith.constant 0 : index
      %c0_29 = arith.constant 0 : index
      %59 = vector.load %arg11[%58, %c0_28, %c0_29] : memref<8x8x128xf32, #tpu.memory_space<vmem>>, vector<1x8x128xf32>
      %60 = vector.shape_cast %59 : vector<1x8x128xf32> to vector<8x128xf32>
      %61 = vector.shape_cast %57 : vector<8x128xf32> to vector<1x8x128xf32>
      tpu.vector_store %arg11[%58, %c0_28, %c0_29], %61 {strides = array<i32>} : memref<8x8x128xf32, #tpu.memory_space<vmem>>, vector<1x8x128xf32>,
      %62 = vector.shape_cast %49 : vector<8x1xi1> to vector<8x1xi1>
      %63 = vector.broadcast %62 : vector<8x1xi1> to vector<8x128xi1>
      %64 = arith.select %63, %47, %arg15 : vector<8x128xi1>, vector<8x128xf32>
      scf.yield %64 : vector<8x128xf32>
    }
    %c8_i32_5 = arith.constant 8 : i32
    %c0_6 = arith.constant 0 : index
    %c0_7 = arith.constant 0 : index
    %6 = vector.load %arg12[%c0_6, %c0_7] : memref<8x128xf32, #tpu.memory_space<vmem>>, vector<8x128xf32>
    tpu.vector_store %arg12[%c0_6, %c0_7], %3 {strides = array<i32>} : memref<8x128xf32, #tpu.memory_space<vmem>>, vector<8x128xf32>,
    %c0_8 = arith.constant 0 : index
    %c0_9 = arith.constant 0 : index
    %7 = vector.load %arg13[%c0_8, %c0_9] : memref<8x128xf32, #tpu.memory_space<vmem>>, vector<8x128xf32>
    tpu.vector_store %arg13[%c0_8, %c0_9], %5 {strides = array<i32>} : memref<8x128xf32, #tpu.memory_space<vmem>>, vector<8x128xf32>,
    return
  }
  func.func @transform_0(%arg0: i32) -> (i32, i32) {
    %c0_i32 = arith.constant 0 : i32
    %c0_i32_0 = arith.constant 0 : i32
    %c0_i32_1 = arith.constant 0 : i32
    return %c0_i32, %c0_i32_0 : i32, i32
  }
  func.func @transform_1(%arg0: i32) -> (i32, i32, i32) {
    %c0_i32 = arith.constant 0 : i32
    %c0_i32_0 = arith.constant 0 : i32
    %c0_i32_1 = arith.constant 0 : i32
    %c0_i32_2 = arith.constant 0 : i32
    return %c0_i32, %c0_i32_0, %c0_i32_1 : i32, i32, i32
  }
  func.func @transform_2(%arg0: i32) -> (i32, i32) {
    %c0_i32 = arith.constant 0 : i32
    %c0_i32_0 = arith.constant 0 : i32
    %c0_i32_1 = arith.constant 0 : i32
    return %c0_i32, %c0_i32_0 : i32, i32
  }
  func.func @transform_3(%arg0: i32) -> (i32, i32) {
    %c0_i32 = arith.constant 0 : i32
    %c0_i32_0 = arith.constant 0 : i32
    %c0_i32_1 = arith.constant 0 : i32
    return %c0_i32, %c0_i32_0 : i32, i32
  }
  func.func @transform_4(%arg0: i32) -> (i32, i32) {
    %c0_i32 = arith.constant 0 : i32
    %c0_i32_0 = arith.constant 0 : i32
    %c0_i32_1 = arith.constant 0 : i32
    return %c0_i32, %c0_i32_0 : i32, i32
  }
  func.func @transform_5(%arg0: i32) -> (i32, i32) {
    %c0_i32 = arith.constant 0 : i32
    %c0_i32_0 = arith.constant 0 : i32
    %c0_i32_1 = arith.constant 0 : i32
    return %c0_i32, %c0_i32_0 : i32, i32
  }
  func.func @transform_6(%arg0: i32) -> (i32, i32) {
    %c0_i32 = arith.constant 0 : i32
    %c0_i32_0 = arith.constant 0 : i32
    %c0_i32_1 = arith.constant 0 : i32
    return %c0_i32, %c0_i32_0 : i32, i32
  }
  func.func @transform_7(%arg0: i32) -> (i32, i32) {
    %c0_i32 = arith.constant 0 : i32
    %c0_i32_0 = arith.constant 0 : i32
    %c0_i32_1 = arith.constant 0 : i32
    return %c0_i32, %c0_i32_0 : i32, i32
  }
  func.func @transform_8(%arg0: i32) -> (i32, i32) {
    %c0_i32 = arith.constant 0 : i32
    %c0_i32_0 = arith.constant 0 : i32
    %c0_i32_1 = arith.constant 0 : i32
    return %c0_i32, %c0_i32_0 : i32, i32
  }
  func.func @transform_9(%arg0: i32) -> (i32, i32) {
    %c0_i32 = arith.constant 0 : i32
    %c0_i32_0 = arith.constant 0 : i32
    %c0_i32_1 = arith.constant 0 : i32
    return %c0_i32, %c0_i32_0 : i32, i32
  }
  func.func @transform_10(%arg0: i32) -> (i32, i32, i32) {
    %c0_i32 = arith.constant 0 : i32
    %c0_i32_0 = arith.constant 0 : i32
    %c0_i32_1 = arith.constant 0 : i32
    %c0_i32_2 = arith.constant 0 : i32
    return %c0_i32, %c0_i32_0, %c0_i32_1 : i32, i32, i32
  }
  func.func @transform_11(%arg0: i32) -> (i32, i32) {
    %c0_i32 = arith.constant 0 : i32
    %c0_i32_0 = arith.constant 0 : i32
    %c0_i32_1 = arith.constant 0 : i32
    return %c0_i32, %c0_i32_0 : i32, i32
  }
  func.func @transform_12(%arg0: i32) -> (i32, i32) {
    %c0_i32 = arith.constant 0 : i32
    %c0_i32_0 = arith.constant 0 : i32
    %c0_i32_1 = arith.constant 0 : i32
    return %c0_i32, %c0_i32_0 : i32, i32
  }
}

</mosaic_0001>

<llo_original>
// kernel: encoder_rnn_forward.1
$region0: #{encoder_rnn_forward.1}
  #allocation0 [shape = 'u32[]', space=smem, size = 0x4, offset = 0x4, fixed_abs, tag = 'smem constant byte address 0x4 - core index']
  #allocation1 [shape = 'u32[72,128]{1,0:T(1,128)}', space=vmem, size = 0x9000, scoped, tag = 'internal scratch']
  %s0 = inlined_call_operand.vmem [shape: s32[8,1], index: 0, kind: input, shape index: {}]
  %s1 = inlined_call_operand.vmem [shape: f32[8,8,128], index: 1, kind: input, shape index: {}]
  %s2 = inlined_call_operand.vmem [shape: f32[128,384], index: 2, kind: input, shape index: {}]
  %s3 = inlined_call_operand.vmem [shape: f32[128,384], index: 3, kind: input, shape index: {}]
  %s4 = inlined_call_operand.vmem [shape: f32[1,384], index: 4, kind: input, shape index: {}]
  %s5 = inlined_call_operand.vmem [shape: f32[1,128], index: 5, kind: input, shape index: {}]
  %s6 = inlined_call_operand.vmem [shape: f32[128,384], index: 6, kind: input, shape index: {}]
  %s7 = inlined_call_operand.vmem [shape: f32[128,384], index: 7, kind: input, shape index: {}]
  %s8 = inlined_call_operand.vmem [shape: f32[1,384], index: 8, kind: input, shape index: {}]
  %s9 = inlined_call_operand.vmem [shape: f32[1,128], index: 9, kind: input, shape index: {}]
  %s10 = inlined_call_operand.vmem [shape: f32[8,8,128], index: 10, kind: output, shape index: {0}]
  %s11 = inlined_call_operand.vmem [shape: f32[8,128], index: 11, kind: output, shape index: {1}]
  %s12 = inlined_call_operand.vmem [shape: f32[8,128], index: 12, kind: output, shape index: {2}]
  %13 = xla_tuple %s10, %s11, %s12
  %s14 = sld [smem:[#allocation0]]
  $region80: #{encoder_rnn_forward.1} parent=0
    _
  %s16 = ssub.s32 1, %s14
  %s17 = scalar_select 0, %s16, %s14
  // Predicated region
  $region2: #{encoder_rnn_forward.1} parent=0 // pred_check
    _
  $region3: #{encoder_rnn_forward.1} parent=0 // pred_check_branch
    %19 = sbr.rel (0) target = $region5
  $region4: #{encoder_rnn_forward.1} parent=0 // pred_region
    _
  $region5: #{encoder_rnn_forward.1} parent=0 // pred_fallthru
    _
  // Predicated region
  $region6: #{encoder_rnn_forward.1} parent=0 // pred_check
    _
  $region7: #{encoder_rnn_forward.1} parent=0 // pred_check_branch
    %21 = sbr.rel (0) target = $region9
  $region8: #{encoder_rnn_forward.1} parent=0 // pred_region
    _
  $region9: #{encoder_rnn_forward.1} parent=0 // pred_fallthru
    _
  // Predicated region
  $region10: #{encoder_rnn_forward.1} parent=0 // pred_check
    _
  $region11: #{encoder_rnn_forward.1} parent=0 // pred_check_branch
    %23 = sbr.rel (0) target = $region13
  $region12: #{encoder_rnn_forward.1} parent=0 // pred_region
    _
  $region13: #{encoder_rnn_forward.1} parent=0 // pred_fallthru
    _
  // Predicated region
  $region14: #{encoder_rnn_forward.1} parent=0 // pred_check
    _
  $region15: #{encoder_rnn_forward.1} parent=0 // pred_check_branch
    %25 = sbr.rel (0) target = $region17
  $region16: #{encoder_rnn_forward.1} parent=0 // pred_region
    _
  $region17: #{encoder_rnn_forward.1} parent=0 // pred_fallthru
    _
  // Predicated region
  $region18: #{encoder_rnn_forward.1} parent=0 // pred_check
    _
  $region19: #{encoder_rnn_forward.1} parent=0 // pred_check_branch
    %27 = sbr.rel (0) target = $region21
  $region20: #{encoder_rnn_forward.1} parent=0 // pred_region
    _
  $region21: #{encoder_rnn_forward.1} parent=0 // pred_fallthru
    _
  // Predicated region
  $region22: #{encoder_rnn_forward.1} parent=0 // pred_check
    _
  $region23: #{encoder_rnn_forward.1} parent=0 // pred_check_branch
    %29 = sbr.rel (0) target = $region25
  $region24: #{encoder_rnn_forward.1} parent=0 // pred_region
    _
  $region25: #{encoder_rnn_forward.1} parent=0 // pred_fallthru
    _
  // Predicated region
  $region26: #{encoder_rnn_forward.1} parent=0 // pred_check
    _
  $region27: #{encoder_rnn_forward.1} parent=0 // pred_check_branch
    %31 = sbr.rel (0) target = $region29
  $region28: #{encoder_rnn_forward.1} parent=0 // pred_region
    _
  $region29: #{encoder_rnn_forward.1} parent=0 // pred_fallthru
    _
  // Predicated region
  $region30: #{encoder_rnn_forward.1} parent=0 // pred_check
    _
  $region31: #{encoder_rnn_forward.1} parent=0 // pred_check_branch
    %33 = sbr.rel (0) target = $region33
  $region32: #{encoder_rnn_forward.1} parent=0 // pred_region
    _
  $region33: #{encoder_rnn_forward.1} parent=0 // pred_fallthru
    _
  // Predicated region
  $region34: #{encoder_rnn_forward.1} parent=0 // pred_check
    _
  $region35: #{encoder_rnn_forward.1} parent=0 // pred_check_branch
    %35 = sbr.rel (0) target = $region37
  $region36: #{encoder_rnn_forward.1} parent=0 // pred_region
    _
  $region37: #{encoder_rnn_forward.1} parent=0 // pred_fallthru
    _
  // Predicated region
  $region38: #{encoder_rnn_forward.1} parent=0 // pred_check
    _
  $region39: #{encoder_rnn_forward.1} parent=0 // pred_check_branch
    %37 = sbr.rel (0) target = $region41
  $region40: #{encoder_rnn_forward.1} parent=0 // pred_region
    _
  $region41: #{encoder_rnn_forward.1} parent=0 // pred_fallthru
    _
  %v38 = vld [vmem:[%s0] sm:$0xff]
  loop: start=0, step=1, limit=8
  $region42: #{encoder_rnn_forward.1} parent=0 // loop_pre_header
    _
  $region43: #{encoder_rnn_forward.1} parent=0 // loop_header
    %s40 = sphi 0, %s44
    %p41 = scmp.ge.s32.totalorder %s40, 8
    %v45 = vphi 0.0, %v335
  $region44: #{encoder_rnn_forward.1} parent=0 // loop_header_branch
    %43 = sbr.rel (%p41) target = $region48
  $region45: #{encoder_rnn_forward.1} parent=0 // loop_body
    %s46 = smul.u32 %s40, 8
    %s47 = scalar_lea.vmem %s1, %s46
    %v48 = vld [vmem:[%s47] sm:$0xff]
    %v49 = vld [vmem:[%s2] sm:$0xff]
    %v50 = vld [vmem:[%s2 + $0x8] sm:$0xff]
    %v51 = vld [vmem:[%s2 + $0x10] sm:$0xff]
    %v52 = vld [vmem:[%s2 + $0x18] sm:$0xff]
    %v53 = vld [vmem:[%s2 + $0x20] sm:$0xff]
    %v54 = vld [vmem:[%s2 + $0x28] sm:$0xff]
    %v55 = vld [vmem:[%s2 + $0x30] sm:$0xff]
    %v56 = vld [vmem:[%s2 + $0x38] sm:$0xff]
    %v57 = vld [vmem:[%s2 + $0x40] sm:$0xff]
    %v58 = vld [vmem:[%s2 + $0x48] sm:$0xff]
    %v59 = vld [vmem:[%s2 + $0x50] sm:$0xff]
    %v60 = vld [vmem:[%s2 + $0x58] sm:$0xff]
    %v61 = vld [vmem:[%s2 + $0x60] sm:$0xff]
    %v62 = vld [vmem:[%s2 + $0x68] sm:$0xff]
    %v63 = vld [vmem:[%s2 + $0x70] sm:$0xff]
    %v64 = vld [vmem:[%s2 + $0x78] sm:$0xff]
    %v65 = vld [vmem:[%s2 + $0x80] sm:$0xff]
    %v66 = vld [vmem:[%s2 + $0x88] sm:$0xff]
    %v67 = vld [vmem:[%s2 + $0x90] sm:$0xff]
    %v68 = vld [vmem:[%s2 + $0x98] sm:$0xff]
    %v69 = vld [vmem:[%s2 + $0xa0] sm:$0xff]
    %v70 = vld [vmem:[%s2 + $0xa8] sm:$0xff]
    %v71 = vld [vmem:[%s2 + $0xb0] sm:$0xff]
    %v72 = vld [vmem:[%s2 + $0xb8] sm:$0xff]
    %v73 = vld [vmem:[%s2 + $0xc0] sm:$0xff]
    %v74 = vld [vmem:[%s2 + $0xc8] sm:$0xff]
    %v75 = vld [vmem:[%s2 + $0xd0] sm:$0xff]
    %v76 = vld [vmem:[%s2 + $0xd8] sm:$0xff]
    %v77 = vld [vmem:[%s2 + $0xe0] sm:$0xff]
    %v78 = vld [vmem:[%s2 + $0xe8] sm:$0xff]
    %v79 = vld [vmem:[%s2 + $0xf0] sm:$0xff]
    %v80 = vld [vmem:[%s2 + $0xf8] sm:$0xff]
    %v81 = vld [vmem:[%s2 + $0x100] sm:$0xff]
    %v82 = vld [vmem:[%s2 + $0x108] sm:$0xff]
    %v83 = vld [vmem:[%s2 + $0x110] sm:$0xff]
    %v84 = vld [vmem:[%s2 + $0x118] sm:$0xff]
    %v85 = vld [vmem:[%s2 + $0x120] sm:$0xff]
    %v86 = vld [vmem:[%s2 + $0x128] sm:$0xff]
    %v87 = vld [vmem:[%s2 + $0x130] sm:$0xff]
    %v88 = vld [vmem:[%s2 + $0x138] sm:$0xff]
    %v89 = vld [vmem:[%s2 + $0x140] sm:$0xff]
    %v90 = vld [vmem:[%s2 + $0x148] sm:$0xff]
    %v91 = vld [vmem:[%s2 + $0x150] sm:$0xff]
    %v92 = vld [vmem:[%s2 + $0x158] sm:$0xff]
    %v93 = vld [vmem:[%s2 + $0x160] sm:$0xff]
    %v94 = vld [vmem:[%s2 + $0x168] sm:$0xff]
    %v95 = vld [vmem:[%s2 + $0x170] sm:$0xff]
    %v96 = vld [vmem:[%s2 + $0x178] sm:$0xff]
    %v97 = vld [vmem:[%s4] sm:$0x7]
    %v99 = vperm.slane %v97, 0
    %v100 = vperm.slane %v97, 1
    %v101 = vperm.slane %v97, 2
    %105 = vmatpush.msra.mxu0 %v94
    %106 = vmatpush.msra.mxu0 %v91
    %107 = vmatpush.msra.mxu0 %v88
    %108 = vmatpush.msra.mxu0 %v85
    %109 = vmatpush.msra.mxu0 %v82
    %110 = vmatpush.msra.mxu0 %v79
    %111 = vmatpush.msra.mxu0 %v76
    %112 = vmatpush.msra.mxu0 %v73
    %113 = vmatpush.msra.mxu0 %v70
    %114 = vmatpush.msra.mxu0 %v67
    %115 = vmatpush.msra.mxu0 %v64
    %116 = vmatpush.msra.mxu0 %v61
    %117 = vmatpush.msra.mxu0 %v58
    %118 = vmatpush.msra.mxu0 %v55
    %119 = vmatpush.msra.mxu0 %v52
    %120 = vmatpush.msra.mxu0 %v49
    %121 = vmatmul.f32.gmra.mxu0 %v48
    %v122 = vpop.f32.mrf.mxu0
    %v123 = vadd.f32 %v99, %v122
    %124 = vdwg.mxu0
    %125 = vmatpush.msra.mxu0 %v95
    %126 = vmatpush.msra.mxu0 %v92
    %127 = vmatpush.msra.mxu0 %v89
    %128 = vmatpush.msra.mxu0 %v86
    %129 = vmatpush.msra.mxu0 %v83
    %130 = vmatpush.msra.mxu0 %v80
    %131 = vmatpush.msra.mxu0 %v77
    %132 = vmatpush.msra.mxu0 %v74
    %133 = vmatpush.msra.mxu0 %v71
    %134 = vmatpush.msra.mxu0 %v68
    %135 = vmatpush.msra.mxu0 %v65
    %136 = vmatpush.msra.mxu0 %v62
    %137 = vmatpush.msra.mxu0 %v59
    %138 = vmatpush.msra.mxu0 %v56
    %139 = vmatpush.msra.mxu0 %v53
    %140 = vmatpush.msra.mxu0 %v50
    %141 = vmatmul.f32.gmra.mxu0 %v48
    %v142 = vpop.f32.mrf.mxu0
    %v143 = vadd.f32 %v100, %v142
    %144 = vdwg.mxu0
    %145 = vmatpush.msra.mxu0 %v96
    %146 = vmatpush.msra.mxu0 %v93
    %147 = vmatpush.msra.mxu0 %v90
    %148 = vmatpush.msra.mxu0 %v87
    %149 = vmatpush.msra.mxu0 %v84
    %150 = vmatpush.msra.mxu0 %v81
    %151 = vmatpush.msra.mxu0 %v78
    %152 = vmatpush.msra.mxu0 %v75
    %153 = vmatpush.msra.mxu0 %v72
    %154 = vmatpush.msra.mxu0 %v69
    %155 = vmatpush.msra.mxu0 %v66
    %156 = vmatpush.msra.mxu0 %v63
    %157 = vmatpush.msra.mxu0 %v60
    %158 = vmatpush.msra.mxu0 %v57
    %159 = vmatpush.msra.mxu0 %v54
    %160 = vmatpush.msra.mxu0 %v51
    %161 = vmatmul.f32.gmra.mxu0 %v48
    %v162 = vpop.f32.mrf.mxu0
    %v163 = vadd.f32 %v101, %v162
    %164 = vdwg.mxu0
    %v165 = vld [vmem:[%s3] sm:$0xff]
    %v166 = vld [vmem:[%s3 + $0x8] sm:$0xff]
    %v167 = vld [vmem:[%s3 + $0x10] sm:$0xff]
    %v168 = vld [vmem:[%s3 + $0x18] sm:$0xff]
    %v169 = vld [vmem:[%s3 + $0x20] sm:$0xff]
    %v170 = vld [vmem:[%s3 + $0x28] sm:$0xff]
    %v171 = vld [vmem:[%s3 + $0x30] sm:$0xff]
    %v172 = vld [vmem:[%s3 + $0x38] sm:$0xff]
    %v173 = vld [vmem:[%s3 + $0x40] sm:$0xff]
    %v174 = vld [vmem:[%s3 + $0x48] sm:$0xff]
    %v175 = vld [vmem:[%s3 + $0x50] sm:$0xff]
    %v176 = vld [vmem:[%s3 + $0x58] sm:$0xff]
    %v177 = vld [vmem:[%s3 + $0x60] sm:$0xff]
    %v178 = vld [vmem:[%s3 + $0x68] sm:$0xff]
    %v179 = vld [vmem:[%s3 + $0x70] sm:$0xff]
    %v180 = vld [vmem:[%s3 + $0x78] sm:$0xff]
    %v181 = vld [vmem:[%s3 + $0x80] sm:$0xff]
    %v182 = vld [vmem:[%s3 + $0x88] sm:$0xff]
    %v183 = vld [vmem:[%s3 + $0x90] sm:$0xff]
    %v184 = vld [vmem:[%s3 + $0x98] sm:$0xff]
    %v185 = vld [vmem:[%s3 + $0xa0] sm:$0xff]
    %v186 = vld [vmem:[%s3 + $0xa8] sm:$0xff]
    %v187 = vld [vmem:[%s3 + $0xb0] sm:$0xff]
    %v188 = vld [vmem:[%s3 + $0xb8] sm:$0xff]
    %v189 = vld [vmem:[%s3 + $0xc0] sm:$0xff]
    %v190 = vld [vmem:[%s3 + $0xc8] sm:$0xff]
    %v191 = vld [vmem:[%s3 + $0xd0] sm:$0xff]
    %v192 = vld [vmem:[%s3 + $0xd8] sm:$0xff]
    %v193 = vld [vmem:[%s3 + $0xe0] sm:$0xff]
    %v194 = vld [vmem:[%s3 + $0xe8] sm:$0xff]
    %v195 = vld [vmem:[%s3 + $0xf0] sm:$0xff]
    %v196 = vld [vmem:[%s3 + $0xf8] sm:$0xff]
    %v197 = vld [vmem:[%s3 + $0x100] sm:$0xff]
    %v198 = vld [vmem:[%s3 + $0x108] sm:$0xff]
    %v199 = vld [vmem:[%s3 + $0x110] sm:$0xff]
    %v200 = vld [vmem:[%s3 + $0x118] sm:$0xff]
    %v201 = vld [vmem:[%s3 + $0x120] sm:$0xff]
    %v202 = vld [vmem:[%s3 + $0x128] sm:$0xff]
    %v203 = vld [vmem:[%s3 + $0x130] sm:$0xff]
    %v204 = vld [vmem:[%s3 + $0x138] sm:$0xff]
    %v205 = vld [vmem:[%s3 + $0x140] sm:$0xff]
    %v206 = vld [vmem:[%s3 + $0x148] sm:$0xff]
    %v207 = vld [vmem:[%s3 + $0x150] sm:$0xff]
    %v208 = vld [vmem:[%s3 + $0x158] sm:$0xff]
    %v209 = vld [vmem:[%s3 + $0x160] sm:$0xff]
    %v210 = vld [vmem:[%s3 + $0x168] sm:$0xff]
    %v211 = vld [vmem:[%s3 + $0x170] sm:$0xff]
    %v212 = vld [vmem:[%s3 + $0x178] sm:$0xff]
    %213 = vmatpush.msra.mxu0 %v210
    %214 = vmatpush.msra.mxu0 %v207
    %215 = vmatpush.msra.mxu0 %v204
    %216 = vmatpush.msra.mxu0 %v201
    %217 = vmatpush.msra.mxu0 %v198
    %218 = vmatpush.msra.mxu0 %v195
    %219 = vmatpush.msra.mxu0 %v192
    %220 = vmatpush.msra.mxu0 %v189
    %221 = vmatpush.msra.mxu0 %v186
    %222 = vmatpush.msra.mxu0 %v183
    %223 = vmatpush.msra.mxu0 %v180
    %224 = vmatpush.msra.mxu0 %v177
    %225 = vmatpush.msra.mxu0 %v174
    %226 = vmatpush.msra.mxu0 %v171
    %227 = vmatpush.msra.mxu0 %v168
    %228 = vmatpush.msra.mxu0 %v165
    %229 = vmatmul.f32.gmra.mxu0 %v45
    %v230 = vpop.f32.mrf.mxu0
    %v231 = vadd.f32 0.0, %v230
    %232 = vdwg.mxu0
    %233 = vmatpush.msra.mxu0 %v211
    %234 = vmatpush.msra.mxu0 %v208
    %235 = vmatpush.msra.mxu0 %v205
    %236 = vmatpush.msra.mxu0 %v202
    %237 = vmatpush.msra.mxu0 %v199
    %238 = vmatpush.msra.mxu0 %v196
    %239 = vmatpush.msra.mxu0 %v193
    %240 = vmatpush.msra.mxu0 %v190
    %241 = vmatpush.msra.mxu0 %v187
    %242 = vmatpush.msra.mxu0 %v184
    %243 = vmatpush.msra.mxu0 %v181
    %244 = vmatpush.msra.mxu0 %v178
    %245 = vmatpush.msra.mxu0 %v175
    %246 = vmatpush.msra.mxu0 %v172
    %247 = vmatpush.msra.mxu0 %v169
    %248 = vmatpush.msra.mxu0 %v166
    %249 = vmatmul.f32.gmra.mxu0 %v45
    %v250 = vpop.f32.mrf.mxu0
    %v251 = vadd.f32 0.0, %v250
    %252 = vdwg.mxu0
    %253 = vmatpush.msra.mxu0 %v212
    %254 = vmatpush.msra.mxu0 %v209
    %255 = vmatpush.msra.mxu0 %v206
    %256 = vmatpush.msra.mxu0 %v203
    %257 = vmatpush.msra.mxu0 %v200
    %258 = vmatpush.msra.mxu0 %v197
    %259 = vmatpush.msra.mxu0 %v194
    %260 = vmatpush.msra.mxu0 %v191
    %261 = vmatpush.msra.mxu0 %v188
    %262 = vmatpush.msra.mxu0 %v185
    %263 = vmatpush.msra.mxu0 %v182
    %264 = vmatpush.msra.mxu0 %v179
    %265 = vmatpush.msra.mxu0 %v176
    %266 = vmatpush.msra.mxu0 %v173
    %267 = vmatpush.msra.mxu0 %v170
    %268 = vmatpush.msra.mxu0 %v167
    %269 = vmatmul.f32.gmra.mxu0 %v45
    %v270 = vpop.f32.mrf.mxu0
    %v271 = vadd.f32 0.0, %v270
    %272 = vdwg.mxu0
    %v273 = vadd.f32 %v123, %v231
    %v274 = vxor.u32 %v273, 2147483648
    %v275 = vmul.f32 %v274, 1.442695
    %v276 = vpow.pop %v275
    %v277 = vadd.f32 %v276, 1.0
    %v278 = vrcp.pop %v277
    %v279 = vmul.f32 %v277, %v278
    %v280 = vsub.f32 1.0, %v279
    %v281 = vmul.f32 %v278, %v280
    %v282 = vadd.f32 %v278, %v281
    %vm283 = vweird.f32 %v277
    %vm284 = vweird.f32 %v278
    %vm285 = vmor %vm283, %vm284
    %v286 = vsel %vm285, %v278, %v282
    %v287 = vand.u32 2147483647, %v277
    %vm288 = vcmp.eq.f32.partialorder %v287, 8.507059e+37
    %v289 = vand.u32 %v277, 2147483648
    %v290 = vor.u32 1.1754944e-38, %v289
    %v291 = vsel %vm288, %v290, %v286
    %v292 = vmul.f32 1.0, %v291
    %v293 = vadd.f32 %v143, %v251
    %v294 = vxor.u32 %v293, 2147483648
    %v295 = vmul.f32 %v294, 1.442695
    %v296 = vpow.pop %v295
    %v297 = vadd.f32 %v296, 1.0
    %v298 = vrcp.pop %v297
    %v299 = vmul.f32 %v297, %v298
    %v300 = vsub.f32 1.0, %v299
    %v301 = vmul.f32 %v298, %v300
    %v302 = vadd.f32 %v298, %v301
    %vm303 = vweird.f32 %v297
    %vm304 = vweird.f32 %v298
    %vm305 = vmor %vm303, %vm304
    %v306 = vsel %vm305, %v298, %v302
    %v307 = vand.u32 2147483647, %v297
    %vm308 = vcmp.eq.f32.partialorder %v307, 8.507059e+37
    %v309 = vand.u32 %v297, 2147483648
    %v310 = vor.u32 1.1754944e-38, %v309
    %v311 = vsel %vm308, %v310, %v306
    %v312 = vmul.f32 1.0, %v311
    %v313 = vld [vmem:[%s5] sm:$0x1]
    %v315 = vperm.slane %v313, 0
    %v317 = vadd.f32 %v271, %v315
    %v318 = vmul.f32 %v292, %v317
    %v319 = vadd.f32 %v163, %v318
    %v320 = vtanh.pop %v319
    %v321 = vsub.f32 1.0, %v312
    %v322 = vmul.f32 %v321, %v320
    %v323 = vmul.f32 %v312, %v45
    %v324 = vadd.f32 %v322, %v323
    %v325 = vstv %s40
    %vm326 = vcmp.gt.s32.totalorder %v38, %v325
    %v327 = vsel %vm326, 1, 0
    %328 = vset.pattern.permute.xlu0 0
    %329 = vperm.xlu0 %328, %v327
    %v330 = vpop.permute.xlu0 %329
    %vm331 = vcmp.eq.s32.totalorder %v330, 1
    %v332 = vsel %vm331, %v324, 0.0
    %s333 = scalar_lea.vmem %s10, %s46
    %334 = vst [vmem:[%s333] sm:$0xff] %v332
    %v335 = vsel %vm331, %v324, %v45
  $region46: #{encoder_rnn_forward.1} parent=0 // loop_footer
    %s44 = sadd.s32 1, %s40
  $region47: #{encoder_rnn_forward.1} parent=0 // loop_footer_branch
    %39 = sbr.rel target = $region43
  $region48: #{encoder_rnn_forward.1} parent=0 // loop_exit
    _
  loop: start=0, step=1, limit=8
  $region49: #{encoder_rnn_forward.1} parent=0 // loop_pre_header
    _
  $region50: #{encoder_rnn_forward.1} parent=0 // loop_header
    %s337 = sphi 0, %s341
    %p338 = scmp.ge.s32.totalorder %s337, 8
    %v342 = vphi 0.0, %v635
  $region51: #{encoder_rnn_forward.1} parent=0 // loop_header_branch
    %340 = sbr.rel (%p338) target = $region55
  $region52: #{encoder_rnn_forward.1} parent=0 // loop_body
    %s343 = ssub.s32 7, %s337
    %s344 = smul.u32 %s343, 8
    %s345 = scalar_lea.vmem %s1, %s344
    %v346 = vld [vmem:[%s345] sm:$0xff]
    %v347 = vld [vmem:[%s6] sm:$0xff]
    %v348 = vld [vmem:[%s6 + $0x8] sm:$0xff]
    %v349 = vld [vmem:[%s6 + $0x10] sm:$0xff]
    %v350 = vld [vmem:[%s6 + $0x18] sm:$0xff]
    %v351 = vld [vmem:[%s6 + $0x20] sm:$0xff]
    %v352 = vld [vmem:[%s6 + $0x28] sm:$0xff]
    %v353 = vld [vmem:[%s6 + $0x30] sm:$0xff]
    %v354 = vld [vmem:[%s6 + $0x38] sm:$0xff]
    %v355 = vld [vmem:[%s6 + $0x40] sm:$0xff]
    %v356 = vld [vmem:[%s6 + $0x48] sm:$0xff]
    %v357 = vld [vmem:[%s6 + $0x50] sm:$0xff]
    %v358 = vld [vmem:[%s6 + $0x58] sm:$0xff]
    %v359 = vld [vmem:[%s6 + $0x60] sm:$0xff]
    %v360 = vld [vmem:[%s6 + $0x68] sm:$0xff]
    %v361 = vld [vmem:[%s6 + $0x70] sm:$0xff]
    %v362 = vld [vmem:[%s6 + $0x78] sm:$0xff]
    %v363 = vld [vmem:[%s6 + $0x80] sm:$0xff]
    %v364 = vld [vmem:[%s6 + $0x88] sm:$0xff]
    %v365 = vld [vmem:[%s6 + $0x90] sm:$0xff]
    %v366 = vld [vmem:[%s6 + $0x98] sm:$0xff]
    %v367 = vld [vmem:[%s6 + $0xa0] sm:$0xff]
    %v368 = vld [vmem:[%s6 + $0xa8] sm:$0xff]
    %v369 = vld [vmem:[%s6 + $0xb0] sm:$0xff]
    %v370 = vld [vmem:[%s6 + $0xb8] sm:$0xff]
    %v371 = vld [vmem:[%s6 + $0xc0] sm:$0xff]
    %v372 = vld [vmem:[%s6 + $0xc8] sm:$0xff]
    %v373 = vld [vmem:[%s6 + $0xd0] sm:$0xff]
    %v374 = vld [vmem:[%s6 + $0xd8] sm:$0xff]
    %v375 = vld [vmem:[%s6 + $0xe0] sm:$0xff]
    %v376 = vld [vmem:[%s6 + $0xe8] sm:$0xff]
    %v377 = vld [vmem:[%s6 + $0xf0] sm:$0xff]
    %v378 = vld [vmem:[%s6 + $0xf8] sm:$0xff]
    %v379 = vld [vmem:[%s6 + $0x100] sm:$0xff]
    %v380 = vld [vmem:[%s6 + $0x108] sm:$0xff]
    %v381 = vld [vmem:[%s6 + $0x110] sm:$0xff]
    %v382 = vld [vmem:[%s6 + $0x118] sm:$0xff]
    %v383 = vld [vmem:[%s6 + $0x120] sm:$0xff]
    %v384 = vld [vmem:[%s6 + $0x128] sm:$0xff]
    %v385 = vld [vmem:[%s6 + $0x130] sm:$0xff]
    %v386 = vld [vmem:[%s6 + $0x138] sm:$0xff]
    %v387 = vld [vmem:[%s6 + $0x140] sm:$0xff]
    %v388 = vld [vmem:[%s6 + $0x148] sm:$0xff]
    %v389 = vld [vmem:[%s6 + $0x150] sm:$0xff]
    %v390 = vld [vmem:[%s6 + $0x158] sm:$0xff]
    %v391 = vld [vmem:[%s6 + $0x160] sm:$0xff]
    %v392 = vld [vmem:[%s6 + $0x168] sm:$0xff]
    %v393 = vld [vmem:[%s6 + $0x170] sm:$0xff]
    %v394 = vld [vmem:[%s6 + $0x178] sm:$0xff]
    %v395 = vld [vmem:[%s8] sm:$0x7]
    %v397 = vperm.slane %v395, 0
    %v398 = vperm.slane %v395, 1
    %v399 = vperm.slane %v395, 2
    %403 = vmatpush.msra.mxu0 %v392
    %404 = vmatpush.msra.mxu0 %v389
    %405 = vmatpush.msra.mxu0 %v386
    %406 = vmatpush.msra.mxu0 %v383
    %407 = vmatpush.msra.mxu0 %v380
    %408 = vmatpush.msra.mxu0 %v377
    %409 = vmatpush.msra.mxu0 %v374
    %410 = vmatpush.msra.mxu0 %v371
    %411 = vmatpush.msra.mxu0 %v368
    %412 = vmatpush.msra.mxu0 %v365
    %413 = vmatpush.msra.mxu0 %v362
    %414 = vmatpush.msra.mxu0 %v359
    %415 = vmatpush.msra.mxu0 %v356
    %416 = vmatpush.msra.mxu0 %v353
    %417 = vmatpush.msra.mxu0 %v350
    %418 = vmatpush.msra.mxu0 %v347
    %419 = vmatmul.f32.gmra.mxu0 %v346
    %v420 = vpop.f32.mrf.mxu0
    %v421 = vadd.f32 %v397, %v420
    %422 = vdwg.mxu0
    %423 = vmatpush.msra.mxu0 %v393
    %424 = vmatpush.msra.mxu0 %v390
    %425 = vmatpush.msra.mxu0 %v387
    %426 = vmatpush.msra.mxu0 %v384
    %427 = vmatpush.msra.mxu0 %v381
    %428 = vmatpush.msra.mxu0 %v378
    %429 = vmatpush.msra.mxu0 %v375
    %430 = vmatpush.msra.mxu0 %v372
    %431 = vmatpush.msra.mxu0 %v369
    %432 = vmatpush.msra.mxu0 %v366
    %433 = vmatpush.msra.mxu0 %v363
    %434 = vmatpush.msra.mxu0 %v360
    %435 = vmatpush.msra.mxu0 %v357
    %436 = vmatpush.msra.mxu0 %v354
    %437 = vmatpush.msra.mxu0 %v351
    %438 = vmatpush.msra.mxu0 %v348
    %439 = vmatmul.f32.gmra.mxu0 %v346
    %v440 = vpop.f32.mrf.mxu0
    %v441 = vadd.f32 %v398, %v440
    %442 = vdwg.mxu0
    %443 = vmatpush.msra.mxu0 %v394
    %444 = vmatpush.msra.mxu0 %v391
    %445 = vmatpush.msra.mxu0 %v388
    %446 = vmatpush.msra.mxu0 %v385
    %447 = vmatpush.msra.mxu0 %v382
    %448 = vmatpush.msra.mxu0 %v379
    %449 = vmatpush.msra.mxu0 %v376
    %450 = vmatpush.msra.mxu0 %v373
    %451 = vmatpush.msra.mxu0 %v370
    %452 = vmatpush.msra.mxu0 %v367
    %453 = vmatpush.msra.mxu0 %v364
    %454 = vmatpush.msra.mxu0 %v361
    %455 = vmatpush.msra.mxu0 %v358
    %456 = vmatpush.msra.mxu0 %v355
    %457 = vmatpush.msra.mxu0 %v352
    %458 = vmatpush.msra.mxu0 %v349
    %459 = vmatmul.f32.gmra.mxu0 %v346
    %v460 = vpop.f32.mrf.mxu0
    %v461 = vadd.f32 %v399, %v460
    %462 = vdwg.mxu0
    %v463 = vld [vmem:[%s7] sm:$0xff]
    %v464 = vld [vmem:[%s7 + $0x8] sm:$0xff]
    %v465 = vld [vmem:[%s7 + $0x10] sm:$0xff]
    %v466 = vld [vmem:[%s7 + $0x18] sm:$0xff]
    %v467 = vld [vmem:[%s7 + $0x20] sm:$0xff]
    %v468 = vld [vmem:[%s7 + $0x28] sm:$0xff]
    %v469 = vld [vmem:[%s7 + $0x30] sm:$0xff]
    %v470 = vld [vmem:[%s7 + $0x38] sm:$0xff]
    %v471 = vld [vmem:[%s7 + $0x40] sm:$0xff]
    %v472 = vld [vmem:[%s7 + $0x48] sm:$0xff]
    %v473 = vld [vmem:[%s7 + $0x50] sm:$0xff]
    %v474 = vld [vmem:[%s7 + $0x58] sm:$0xff]
    %v475 = vld [vmem:[%s7 + $0x60] sm:$0xff]
    %v476 = vld [vmem:[%s7 + $0x68] sm:$0xff]
    %v477 = vld [vmem:[%s7 + $0x70] sm:$0xff]
    %v478 = vld [vmem:[%s7 + $0x78] sm:$0xff]
    %v479 = vld [vmem:[%s7 + $0x80] sm:$0xff]
    %v480 = vld [vmem:[%s7 + $0x88] sm:$0xff]
    %v481 = vld [vmem:[%s7 + $0x90] sm:$0xff]
    %v482 = vld [vmem:[%s7 + $0x98] sm:$0xff]
    %v483 = vld [vmem:[%s7 + $0xa0] sm:$0xff]
    %v484 = vld [vmem:[%s7 + $0xa8] sm:$0xff]
    %v485 = vld [vmem:[%s7 + $0xb0] sm:$0xff]
    %v486 = vld [vmem:[%s7 + $0xb8] sm:$0xff]
    %v487 = vld [vmem:[%s7 + $0xc0] sm:$0xff]
    %v488 = vld [vmem:[%s7 + $0xc8] sm:$0xff]
    %v489 = vld [vmem:[%s7 + $0xd0] sm:$0xff]
    %v490 = vld [vmem:[%s7 + $0xd8] sm:$0xff]
    %v491 = vld [vmem:[%s7 + $0xe0] sm:$0xff]
    %v492 = vld [vmem:[%s7 + $0xe8] sm:$0xff]
    %v493 = vld [vmem:[%s7 + $0xf0] sm:$0xff]
    %v494 = vld [vmem:[%s7 + $0xf8] sm:$0xff]
    %v495 = vld [vmem:[%s7 + $0x100] sm:$0xff]
    %v496 = vld [vmem:[%s7 + $0x108] sm:$0xff]
    %v497 = vld [vmem:[%s7 + $0x110] sm:$0xff]
    %v498 = vld [vmem:[%s7 + $0x118] sm:$0xff]
    %v499 = vld [vmem:[%s7 + $0x120] sm:$0xff]
    %v500 = vld [vmem:[%s7 + $0x128] sm:$0xff]
    %v501 = vld [vmem:[%s7 + $0x130] sm:$0xff]
    %v502 = vld [vmem:[%s7 + $0x138] sm:$0xff]
    %v503 = vld [vmem:[%s7 + $0x140] sm:$0xff]
    %v504 = vld [vmem:[%s7 + $0x148] sm:$0xff]
    %v505 = vld [vmem:[%s7 + $0x150] sm:$0xff]
    %v506 = vld [vmem:[%s7 + $0x158] sm:$0xff]
    %v507 = vld [vmem:[%s7 + $0x160] sm:$0xff]
    %v508 = vld [vmem:[%s7 + $0x168] sm:$0xff]
    %v509 = vld [vmem:[%s7 + $0x170] sm:$0xff]
    %v510 = vld [vmem:[%s7 + $0x178] sm:$0xff]
    %511 = vmatpush.msra.mxu0 %v508
    %512 = vmatpush.msra.mxu0 %v505
    %513 = vmatpush.msra.mxu0 %v502
    %514 = vmatpush.msra.mxu0 %v499
    %515 = vmatpush.msra.mxu0 %v496
    %516 = vmatpush.msra.mxu0 %v493
    %517 = vmatpush.msra.mxu0 %v490
    %518 = vmatpush.msra.mxu0 %v487
    %519 = vmatpush.msra.mxu0 %v484
    %520 = vmatpush.msra.mxu0 %v481
    %521 = vmatpush.msra.mxu0 %v478
    %522 = vmatpush.msra.mxu0 %v475
    %523 = vmatpush.msra.mxu0 %v472
    %524 = vmatpush.msra.mxu0 %v469
    %525 = vmatpush.msra.mxu0 %v466
    %526 = vmatpush.msra.mxu0 %v463
    %527 = vmatmul.f32.gmra.mxu0 %v342
    %v528 = vpop.f32.mrf.mxu0
    %v529 = vadd.f32 0.0, %v528
    %530 = vdwg.mxu0
    %531 = vmatpush.msra.mxu0 %v509
    %532 = vmatpush.msra.mxu0 %v506
    %533 = vmatpush.msra.mxu0 %v503
    %534 = vmatpush.msra.mxu0 %v500
    %535 = vmatpush.msra.mxu0 %v497
    %536 = vmatpush.msra.mxu0 %v494
    %537 = vmatpush.msra.mxu0 %v491
    %538 = vmatpush.msra.mxu0 %v488
    %539 = vmatpush.msra.mxu0 %v485
    %540 = vmatpush.msra.mxu0 %v482
    %541 = vmatpush.msra.mxu0 %v479
    %542 = vmatpush.msra.mxu0 %v476
    %543 = vmatpush.msra.mxu0 %v473
    %544 = vmatpush.msra.mxu0 %v470
    %545 = vmatpush.msra.mxu0 %v467
    %546 = vmatpush.msra.mxu0 %v464
    %547 = vmatmul.f32.gmra.mxu0 %v342
    %v548 = vpop.f32.mrf.mxu0
    %v549 = vadd.f32 0.0, %v548
    %550 = vdwg.mxu0
    %551 = vmatpush.msra.mxu0 %v510
    %552 = vmatpush.msra.mxu0 %v507
    %553 = vmatpush.msra.mxu0 %v504
    %554 = vmatpush.msra.mxu0 %v501
    %555 = vmatpush.msra.mxu0 %v498
    %556 = vmatpush.msra.mxu0 %v495
    %557 = vmatpush.msra.mxu0 %v492
    %558 = vmatpush.msra.mxu0 %v489
    %559 = vmatpush.msra.mxu0 %v486
    %560 = vmatpush.msra.mxu0 %v483
    %561 = vmatpush.msra.mxu0 %v480
    %562 = vmatpush.msra.mxu0 %v477
    %563 = vmatpush.msra.mxu0 %v474
    %564 = vmatpush.msra.mxu0 %v471
    %565 = vmatpush.msra.mxu0 %v468
    %566 = vmatpush.msra.mxu0 %v465
    %567 = vmatmul.f32.gmra.mxu0 %v342
    %v568 = vpop.f32.mrf.mxu0
    %v569 = vadd.f32 0.0, %v568
    %570 = vdwg.mxu0
    %v571 = vadd.f32 %v421, %v529
    %v572 = vxor.u32 %v571, 2147483648
    %v573 = vmul.f32 %v572, 1.442695
    %v574 = vpow.pop %v573
    %v575 = vadd.f32 %v574, 1.0
    %v576 = vrcp.pop %v575
    %v577 = vmul.f32 %v575, %v576
    %v578 = vsub.f32 1.0, %v577
    %v579 = vmul.f32 %v576, %v578
    %v580 = vadd.f32 %v576, %v579
    %vm581 = vweird.f32 %v575
    %vm582 = vweird.f32 %v576
    %vm583 = vmor %vm581, %vm582
    %v584 = vsel %vm583, %v576, %v580
    %v585 = vand.u32 2147483647, %v575
    %vm586 = vcmp.eq.f32.partialorder %v585, 8.507059e+37
    %v587 = vand.u32 %v575, 2147483648
    %v588 = vor.u32 1.1754944e-38, %v587
    %v589 = vsel %vm586, %v588, %v584
    %v590 = vmul.f32 1.0, %v589
    %v591 = vadd.f32 %v441, %v549
    %v592 = vxor.u32 %v591, 2147483648
    %v593 = vmul.f32 %v592, 1.442695
    %v594 = vpow.pop %v593
    %v595 = vadd.f32 %v594, 1.0
    %v596 = vrcp.pop %v595
    %v597 = vmul.f32 %v595, %v596
    %v598 = vsub.f32 1.0, %v597
    %v599 = vmul.f32 %v596, %v598
    %v600 = vadd.f32 %v596, %v599
    %vm601 = vweird.f32 %v595
    %vm602 = vweird.f32 %v596
    %vm603 = vmor %vm601, %vm602
    %v604 = vsel %vm603, %v596, %v600
    %v605 = vand.u32 2147483647, %v595
    %vm606 = vcmp.eq.f32.partialorder %v605, 8.507059e+37
    %v607 = vand.u32 %v595, 2147483648
    %v608 = vor.u32 1.1754944e-38, %v607
    %v609 = vsel %vm606, %v608, %v604
    %v610 = vmul.f32 1.0, %v609
    %v611 = vld [vmem:[%s9] sm:$0x1]
    %v613 = vperm.slane %v611, 0
    %v615 = vadd.f32 %v569, %v613
    %v616 = vmul.f32 %v590, %v615
    %v617 = vadd.f32 %v461, %v616
    %v618 = vtanh.pop %v617
    %v619 = vsub.f32 1.0, %v610
    %v620 = vmul.f32 %v619, %v618
    %v621 = vmul.f32 %v610, %v342
    %v622 = vadd.f32 %v620, %v621
    %v623 = vstv %s343
    %vm624 = vcmp.gt.s32.totalorder %v38, %v623
    %s625 = scalar_lea.vmem %s10, %s344
    %v626 = vld [vmem:[%s625] sm:$0xff]
    %v627 = vsel %vm624, 1, 0
    %628 = vset.pattern.permute.xlu0 0
    %629 = vperm.xlu0 %628, %v627
    %v630 = vpop.permute.xlu0 %629
    %vm631 = vcmp.eq.s32.totalorder %v630, 1
    %v632 = vsel %vm631, %v622, 0.0
    %v633 = vadd.f32 %v626, %v632
    %634 = vst [vmem:[%s625] sm:$0xff] %v633
    %v635 = vsel %vm631, %v622, %v342
  $region53: #{encoder_rnn_forward.1} parent=0 // loop_footer
    %s341 = sadd.s32 1, %s337
  $region54: #{encoder_rnn_forward.1} parent=0 // loop_footer_branch
    %336 = sbr.rel target = $region50
  $region55: #{encoder_rnn_forward.1} parent=0 // loop_exit
    _
  %636 = vst [vmem:[%s11] sm:$0xff] %v45
  %637 = vst [vmem:[%s12] sm:$0xff] %v342
  // Predicated region
  $region56: #{encoder_rnn_forward.1} parent=0 // pred_check
    _
  $region57: #{encoder_rnn_forward.1} parent=0 // pred_check_branch
    %639 = sbr.rel (0) target = $region59
  $region58: #{encoder_rnn_forward.1} parent=0 // pred_region
    _
  $region59: #{encoder_rnn_forward.1} parent=0 // pred_fallthru
    _
  // Predicated region
  $region60: #{encoder_rnn_forward.1} parent=0 // pred_check
    _
  $region61: #{encoder_rnn_forward.1} parent=0 // pred_check_branch
    %641 = sbr.rel (0) target = $region63
  $region62: #{encoder_rnn_forward.1} parent=0 // pred_region
    _
  $region63: #{encoder_rnn_forward.1} parent=0 // pred_fallthru
    _
  // Predicated region
  $region64: #{encoder_rnn_forward.1} parent=0 // pred_check
    _
  $region65: #{encoder_rnn_forward.1} parent=0 // pred_check_branch
    %643 = sbr.rel (0) target = $region67
  $region66: #{encoder_rnn_forward.1} parent=0 // pred_region
    _
  $region67: #{encoder_rnn_forward.1} parent=0 // pred_fallthru
    _
  // Predicated region
  $region68: #{encoder_rnn_forward.1} parent=0 // pred_check
    _
  $region69: #{encoder_rnn_forward.1} parent=0 // pred_check_branch
    %645 = sbr.rel (0) target = $region71
  $region70: #{encoder_rnn_forward.1} parent=0 // pred_region
    _
  $region71: #{encoder_rnn_forward.1} parent=0 // pred_fallthru
    _
  // Predicated region
  $region72: #{encoder_rnn_forward.1} parent=0 // pred_check
    _
  $region73: #{encoder_rnn_forward.1} parent=0 // pred_check_branch
    %647 = sbr.rel (0) target = $region75
  $region74: #{encoder_rnn_forward.1} parent=0 // pred_region
    _
  $region75: #{encoder_rnn_forward.1} parent=0 // pred_fallthru
    _
  // Predicated region
  $region76: #{encoder_rnn_forward.1} parent=0 // pred_check
    _
  $region77: #{encoder_rnn_forward.1} parent=0 // pred_check_branch
    %649 = sbr.rel (0) target = $region79
  $region78: #{encoder_rnn_forward.1} parent=0 // pred_region
    _
  $region79: #{encoder_rnn_forward.1} parent=0 // pred_fallthru
    _

</llo_original>
